<compile_context>
chip_gen: v6e
topology: v6e:2x2x1
jax: 0.10.0
libtpu: 0.0.40
codegen_flags: <defaults>
</compile_context>

<pallas_src>
import numpy as np
import jax
import jax.numpy as jnp
from jax.experimental import pallas as pl
from jax.experimental.pallas import tpu as pltpu


def _round_up(x: int, m: int) -> int:
    return ((x + m - 1) // m) * m


def _make_kernel(N: int, M: int):
    def kernel(x_ref, o_ref):
        # x_ref: (TB, N*N) VMEM block (flattened row-major NxN matrices)
        # o_ref: (TB, M)   VMEM block
        # Row r of the NxN matrix occupies flat columns [r*N, (r+1)*N); its
        # upper-triangular suffix is flat columns [r*N + r, (r+1)*N).
        # Build the whole slab in vregs, then issue ONE full-block store.
        # TODO(synk): for very large N (>~256) chunk this unroll / add a grid
        # axis over row blocks to bound trace size.
        pieces = [x_ref[:, r * N + r:(r + 1) * N] for r in range(N)]
        o_ref[...] = jnp.concatenate(pieces, axis=1)

    return kernel


def _pick_batch_tile(B: int, N: int, M: int, itemsize: int) -> int:
    """Dtype-aware batch tile: multiple of the sublane pack, double-buffered
    in+out blocks under ~24 MiB (VMEM-padded widths), >= 2 grid steps so the
    parallel axis shards across both v7x TensorCores, prefers a divisor of B."""
    sub = max(8, 8 * (4 // max(1, itemsize)))       # 8 (f32) / 16 (bf16) / 32 (i8)
    if B <= sub:
        return B                                    # full-dim block is always legal

    in_lanes = _round_up(N * N, 128)                # VMEM lane padding of the blocks
    out_lanes = _round_up(M, 128)
    per_b = (in_lanes + out_lanes) * itemsize
    budget = 24 << 20                               # headroom under 32 MiB scoped VMEM
    cap = budget // (2 * per_b)                     # double-buffered in + out
    cap = min(cap, -(-B // 2))                      # keep grid >= 2 (v7x megacore)
    cap = (cap // sub) * sub
    cap = max(sub, min(cap, B))

    for tb in range(cap, sub - 1, -sub):            # largest sub-multiple dividing B
        if B % tb == 0:
            return tb
    return cap                                      # ragged last block; Pallas masks it


def make_vectorize(input_size: int, batch_tile: int | None = None):
    """Returns (vectorize_fn, row_idx, col_idx) mirroring the nn.Module buffers."""
    N = int(input_size)
    row_idx_np, col_idx_np = np.triu_indices(N)
    row_idx = jnp.asarray(row_idx_np, dtype=jnp.int32)
    col_idx = jnp.asarray(col_idx_np, dtype=jnp.int32)

    M = row_idx_np.shape[0]                         # N*(N+1)//2
    kernel = _make_kernel(N, M)

    def vectorize(x):
        assert x.ndim == 3 and x.shape[1] == N and x.shape[2] == N
        B = x.shape[0]
        itemsize = jnp.dtype(x.dtype).itemsize
        tb = batch_tile if batch_tile is not None else _pick_batch_tile(
            B, N, M, itemsize)

        x_flat = x.reshape(B, N * N)                # free, contiguous reshape

        out = pl.pallas_call(
            kernel,
            out_shape=jax.ShapeDtypeStruct((B, M), x.dtype),
            grid=(pl.cdiv(B, tb),),
            in_specs=[pl.BlockSpec((tb, N * N), lambda i: (i, 0))],
            out_specs=pl.BlockSpec((tb, M), lambda i: (i, 0)),
            compiler_params=pltpu.CompilerParams(
                dimension_semantics=("parallel",),   # shard batch across TCs (v7x)
                vmem_limit_bytes=32 << 20,           # safe on v5e/v6e/v7x
            ),
            cost_estimate=pl.CostEstimate(
                flops=0, transcendentals=0,
                bytes_accessed=B * (N * N + M) * itemsize),
        )(x_flat)
        return out

    return vectorize, row_idx, col_idx


if __name__ == "__main__":
    B, N = 16, 16
    key = jax.random.PRNGKey(0)
    x = jax.random.normal(key, (B, N, N), dtype=jnp.float32)

    # batch_tile=8 -> grid of 2 steps: exercises batch tiling / pipelining.
    vectorize, row_idx, col_idx = make_vectorize(N, batch_tile=8)

    out = vectorize(x)
    out = jax.block_until_ready(out)

    # Reference (pure JAX) check of the gather semantics — copies are bit-exact.
    ref = x[:, row_idx, col_idx]
    assert out.shape == (B, N * (N + 1) // 2)
    np.testing.assert_allclose(np.asarray(out), np.asarray(ref), rtol=0, atol=0)

    # Also exercise the automatic tile picker path.
    vectorize_auto, _, _ = make_vectorize(N)
    out2 = jax.block_until_ready(vectorize_auto(x))
    np.testing.assert_allclose(np.asarray(out2), np.asarray(ref), rtol=0, atol=0)

    print("KERNEL_OK")
</pallas_src>

<mosaic_0001>
module attributes {stable_mosaic.version = 11 : i64} {
  func.func @kernel(%arg0: i32, %arg1: memref<8x256xf32, #tpu.memory_space<vmem>>, %arg2: memref<8x136xf32, #tpu.memory_space<vmem>>) attributes {dimension_semantics = [#tpu.dimension_semantics<parallel>], iteration_bounds = array<i64: 2>, scalar_prefetch = 0 : i64, scratch_operands = 0 : i64, tpu.core_type = #tpu.core_type<tc>, window_params = [{transform_indices = @transform_0, window_bounds = array<i64: 8, 256>}, {transform_indices = @transform_1, window_bounds = array<i64: 8, 136>}]} {
    %c0 = arith.constant 0 : index
    %c0_0 = arith.constant 0 : index
    %0 = vector.load %arg1[%c0, %c0_0] : memref<8x256xf32, #tpu.memory_space<vmem>>, vector<8x16xf32>
    %c0_1 = arith.constant 0 : index
    %c17 = arith.constant 17 : index
    %1 = vector.load %arg1[%c0_1, %c17] : memref<8x256xf32, #tpu.memory_space<vmem>>, vector<8x15xf32>
    %c0_2 = arith.constant 0 : index
    %c34 = arith.constant 34 : index
    %2 = vector.load %arg1[%c0_2, %c34] : memref<8x256xf32, #tpu.memory_space<vmem>>, vector<8x14xf32>
    %c0_3 = arith.constant 0 : index
    %c51 = arith.constant 51 : index
    %3 = vector.load %arg1[%c0_3, %c51] : memref<8x256xf32, #tpu.memory_space<vmem>>, vector<8x13xf32>
    %c0_4 = arith.constant 0 : index
    %c68 = arith.constant 68 : index
    %4 = vector.load %arg1[%c0_4, %c68] : memref<8x256xf32, #tpu.memory_space<vmem>>, vector<8x12xf32>
    %c0_5 = arith.constant 0 : index
    %c85 = arith.constant 85 : index
    %5 = vector.load %arg1[%c0_5, %c85] : memref<8x256xf32, #tpu.memory_space<vmem>>, vector<8x11xf32>
    %c0_6 = arith.constant 0 : index
    %c102 = arith.constant 102 : index
    %6 = vector.load %arg1[%c0_6, %c102] : memref<8x256xf32, #tpu.memory_space<vmem>>, vector<8x10xf32>
    %c0_7 = arith.constant 0 : index
    %c119 = arith.constant 119 : index
    %7 = vector.load %arg1[%c0_7, %c119] : memref<8x256xf32, #tpu.memory_space<vmem>>, vector<8x9xf32>
    %c0_8 = arith.constant 0 : index
    %c136 = arith.constant 136 : index
    %8 = vector.load %arg1[%c0_8, %c136] : memref<8x256xf32, #tpu.memory_space<vmem>>, vector<8x8xf32>
    %c0_9 = arith.constant 0 : index
    %c153 = arith.constant 153 : index
    %9 = vector.load %arg1[%c0_9, %c153] : memref<8x256xf32, #tpu.memory_space<vmem>>, vector<8x7xf32>
    %c0_10 = arith.constant 0 : index
    %c170 = arith.constant 170 : index
    %10 = vector.load %arg1[%c0_10, %c170] : memref<8x256xf32, #tpu.memory_space<vmem>>, vector<8x6xf32>
    %c0_11 = arith.constant 0 : index
    %c187 = arith.constant 187 : index
    %11 = vector.load %arg1[%c0_11, %c187] : memref<8x256xf32, #tpu.memory_space<vmem>>, vector<8x5xf32>
    %c0_12 = arith.constant 0 : index
    %c204 = arith.constant 204 : index
    %12 = vector.load %arg1[%c0_12, %c204] : memref<8x256xf32, #tpu.memory_space<vmem>>, vector<8x4xf32>
    %c0_13 = arith.constant 0 : index
    %c221 = arith.constant 221 : index
    %13 = vector.load %arg1[%c0_13, %c221] : memref<8x256xf32, #tpu.memory_space<vmem>>, vector<8x3xf32>
    %c0_14 = arith.constant 0 : index
    %c238 = arith.constant 238 : index
    %14 = vector.load %arg1[%c0_14, %c238] : memref<8x256xf32, #tpu.memory_space<vmem>>, vector<8x2xf32>
    %c0_15 = arith.constant 0 : index
    %c255 = arith.constant 255 : index
    %15 = vector.load %arg1[%c0_15, %c255] : memref<8x256xf32, #tpu.memory_space<vmem>>, vector<8x1xf32>
    %16 = tpu.concatenate %0, %1, %2, %3, %4, %5, %6, %7, %8, %9, %10, %11, %12, %13, %14, %15 in 1 : vector<8x16xf32>, vector<8x15xf32>, vector<8x14xf32>, vector<8x13xf32>, vector<8x12xf32>, vector<8x11xf32>, vector<8x10xf32>, vector<8x9xf32>, vector<8x8xf32>, vector<8x7xf32>, vector<8x6xf32>, vector<8x5xf32>, vector<8x4xf32>, vector<8x3xf32>, vector<8x2xf32>, vector<8x1xf32> -> vector<8x136xf32>
    %c0_16 = arith.constant 0 : index
    %c0_17 = arith.constant 0 : index
    %17 = vector.load %arg2[%c0_16, %c0_17] : memref<8x136xf32, #tpu.memory_space<vmem>>, vector<8x136xf32>
    tpu.vector_store %arg2[%c0_16, %c0_17], %16 {strides = array<i32>} : memref<8x136xf32, #tpu.memory_space<vmem>>, vector<8x136xf32>,
    return
  }
  func.func @transform_0(%arg0: i32) -> (i32, i32) {
    %c0_i32 = arith.constant 0 : i32
    %c0_i32_0 = arith.constant 0 : i32
    return %arg0, %c0_i32 : i32, i32
  }
  func.func @transform_1(%arg0: i32) -> (i32, i32) {
    %c0_i32 = arith.constant 0 : i32
    %c0_i32_0 = arith.constant 0 : i32
    return %arg0, %c0_i32 : i32, i32
  }
}

</mosaic_0001>

<llo_original>
// kernel: tpu_custom_call.1
$region0: #{tpu_custom_call.1}
  #allocation0 [shape = 'u32[]', space=smem, size = 0x4, offset = 0x4, fixed_abs, tag = 'smem constant byte address 0x4 - core index']
  #allocation1 [shape = 'u32[144,128]{1,0:T(1,128)}', space=vmem, size = 0x12000, scoped, tag = 'internal scratch']
  %s0 = inlined_call_operand.hbm [shape: f32[16,256], index: 0, kind: input, shape index: {}]
  %s1 = inlined_call_operand.hbm [shape: f32[16,136], index: 1, kind: output, shape index: {}]
  %s2 = sld [smem:[#allocation0]]
  $region41: #{tpu_custom_call.1} parent=0
    _
  %s4 = ssub.s32 1, %s2
  %s5 = scalar_select 0, %s4, %s2
  $region1: #{tpu_custom_call.1} parent=0
    #allocation2 [shape = 'u8[16384]{0}', space=vmem, size = 0x4000, scoped, tag = 'input window, operand 0']
    #allocation3 [shape = 's32[2]{0}', space=sflag, size = 0x8, scoped, tag = 'scoped memory for tpu_custom_call.1']
    #allocation4 [shape = 's32[2]{0}', space=sflag, size = 0x8, scoped, tag = 'scoped memory for tpu_custom_call.1']
    #allocation5 [shape = 'u8[16384]{0}', space=vmem, size = 0x4000, scoped, tag = 'output window, operand 0']
    %6 = vsyncpa [#allocation3], 0
    %s7 = scalar_lea.sflag [#allocation3], 1
    %8 = vsyncpa %s7, 0
    %9 = vsyncpa [#allocation4], 0
    %s10 = scalar_lea.sflag [#allocation4], 1
    %11 = vsyncpa %s10, 0
    loop: start=0, step=1, limit=4
    $region2: #{tpu_custom_call.1} parent=1 // loop_pre_header
      _
    $region3: #{tpu_custom_call.1} parent=1 // loop_header
      %s13 = sphi 0, %s17
      %p14 = scmp.ge.s32.totalorder %s13, 4
      %s23 = sphi 0, %s25
      %s26 = sphi 0, %s23
      %s27 = sphi 0, %s26
      %s43 = sphi 0, %s27
      %s49 = sphi 0, %s51
      %s52 = sphi 0, %s49
      %s53 = sphi 0, %s52
      %s69 = sphi 0, %s53
    $region4: #{tpu_custom_call.1} parent=1 // loop_header_branch
      %16 = sbr.rel (%p14) target = $region8
    $region5: #{tpu_custom_call.1} parent=1 // loop_body
      %s18 = ssub.s32 %s13, 1
      %s19 = ssub.s32 %s13, 2
      %s20 = sadd.s32 %s13, 1
      %s21 = ssub.s32 %s13, %s20
      %p22 = scmp.eq.s32.totalorder %s21, 0
      %s24 = sadd.s32 %s23, 1
      %s25 = scalar_select %p22, %s23, %s24
      %p28 = pneg %p22
      %p29 = scmp.eq.s32.totalorder %s13, 1
      %p30 = por %p28, %p29
      %p31 = scmp.ne.s32.totalorder %s23, %s26
      %p32 = scmp.eq.s32.totalorder %s13, 0
      %p33 = por %p31, %p32
      %p34 = scmp.ne.s32.totalorder %s23, %s26
      %p35 = scmp.eq.s32.totalorder %s18, 1
      %p36 = por %p34, %p35
      %p37 = scmp.ne.s32.totalorder %s26, %s27
      %p38 = scmp.eq.s32.totalorder %s18, 0
      %p39 = por %p37, %p38
      %p40 = scmp.ne.s32.totalorder %s26, %s27
      %p41 = scmp.eq.s32.totalorder %s19, 1
      %p42 = por %p40, %p41
      %p44 = scmp.ne.s32.totalorder %s27, %s43
      %p45 = scmp.eq.s32.totalorder %s19, 0
      %p46 = por %p44, %p45
      %s47 = ssub.s32 %s13, %s20
      %p48 = scmp.eq.s32.totalorder %s47, 0
      %s50 = sadd.s32 %s49, 1
      %s51 = scalar_select %p48, %s49, %s50
      %p54 = pneg %p48
      %p55 = scmp.eq.s32.totalorder %s13, 1
      %p56 = por %p54, %p55
      %p57 = scmp.ne.s32.totalorder %s49, %s52
      %p58 = scmp.eq.s32.totalorder %s13, 0
      %p59 = por %p57, %p58
      %p60 = scmp.ne.s32.totalorder %s49, %s52
      %p61 = scmp.eq.s32.totalorder %s18, 1
      %p62 = por %p60, %p61
      %p63 = scmp.ne.s32.totalorder %s52, %s53
      %p64 = scmp.eq.s32.totalorder %s18, 0
      %p65 = por %p63, %p64
      %p66 = scmp.ne.s32.totalorder %s52, %s53
      %p67 = scmp.eq.s32.totalorder %s19, 1
      %p68 = por %p66, %p67
      %p70 = scmp.ne.s32.totalorder %s53, %s69
      %p71 = scmp.eq.s32.totalorder %s19, 0
      %p72 = por %p70, %p71
      %p73 = scmp.le.s32.totalorder 1, %s13
      %p74 = scmp.lt.s32.totalorder %s13, 3
      %p75 = pnand %p73, %p74
      %p76 = pneg %p75
      // Predicated region
      $region9: #{tpu_custom_call.1} parent=5 // pred_check
        _
      $region10: #{tpu_custom_call.1} parent=5 // pred_check_branch
        %78 = sbr.rel (%p75) target = $region12
      $region11: #{tpu_custom_call.1} parent=5 // pred_region
        %s79 = ssub.s32 %s13, 1
      $region12: #{tpu_custom_call.1} parent=5 // pred_fallthru
        _
      %p80 = scmp.lt.s32.totalorder %s13, 2
      // Predicated region
      $region13: #{tpu_custom_call.1} parent=5 // pred_check
        %p81 = pneg %p80
      $region14: #{tpu_custom_call.1} parent=5 // pred_check_branch
        %83 = sbr.rel (%p81) target = $region16
      $region15: #{tpu_custom_call.1} parent=5 // pred_region
        // Predicated region
        $region17: #{tpu_custom_call.1} parent=15 // pred_check
          %p84 = pneg %p33
        $region18: #{tpu_custom_call.1} parent=15 // pred_check_branch
          %86 = sbr.rel (%p84) target = $region20
        $region19: #{tpu_custom_call.1} parent=15 // pred_region
          %s87 = sand.u32 %s23, 1
          %s88 = scalar_lea.sflag [#allocation3], %s87
          %s89 = sand.u32 %s23, 1
          %s90 = smul.addr %s89, 16
          %s91 = scalar_lea.vmem [#allocation2], %s90
          %s93 = ssub.s32 256, 256
          %94 = vsyncadd %s88, %s93
          %s95 = smul.addr %s13, 2
          %s96 = smul.addr %s95, 128
          %s97 = scalar_lea.hbm %s0, %s96
          %s99 = sshll.u32 %s91, 4
          %s100 = int_to_ptr.vmem [resolvable:$true] %s99
          %102 = dma.hbm_to_vmem [thread:$0]  %s97, 256, %s100, %s88
        $region20: #{tpu_custom_call.1} parent=15 // pred_fallthru
          _
      $region16: #{tpu_custom_call.1} parent=5 // pred_fallthru
        _
      %p103 = scmp.le.s32.totalorder 1, %s13
      %p104 = scmp.lt.s32.totalorder %s13, 3
      %p105 = pnand %p103, %p104
      %p106 = pneg %p105
      // Predicated region
      $region21: #{tpu_custom_call.1} parent=5 // pred_check
        _
      $region22: #{tpu_custom_call.1} parent=5 // pred_check_branch
        %108 = sbr.rel (%p105) target = $region24
      $region23: #{tpu_custom_call.1} parent=5 // pred_region
        %s109 = ssub.s32 %s13, 1
        %s110 = sand.u32 %s26, 1
        %s111 = scalar_lea.sflag [#allocation3], %s110
        %s112 = sand.u32 %s26, 1
        %s113 = smul.addr %s112, 16
        %s114 = scalar_lea.vmem [#allocation2], %s113
        // Predicated region
        $region25: #{tpu_custom_call.1} parent=23 // pred_check
          %p115 = pneg %p39
        $region26: #{tpu_custom_call.1} parent=23 // pred_check_branch
          %117 = sbr.rel (%p115) target = $region28
        $region27: #{tpu_custom_call.1} parent=23 // pred_region
          %118 = dma.done %s111, 256
        $region28: #{tpu_custom_call.1} parent=23 // pred_fallthru
          _
        %s119 = sand.u32 %s26, 1
        %s120 = scalar_lea.sflag [#allocation3], %s119
        %s121 = sand.u32 %s26, 1
        %s122 = smul.addr %s121, 16
        %s123 = scalar_lea.vmem [#allocation2], %s122
        %p124 = pneg %p39
        %p125 = pneg %p36
        %p126 = pneg %p65
        %p127 = pneg %p62
        %s128 = sand.u32 %s52, 1
        %s129 = scalar_lea.sflag [#allocation4], %s128
        %s130 = sand.u32 %s52, 1
        %s131 = smul.addr %s130, 16
        %s132 = scalar_lea.vmem [#allocation5], %s131
        %v133 = vld [vmem:[%s114] sm:$0xff]
        %v134 = vld [vmem:[%s114 + $0x8] sm:$0xff]
        %136 = vrot.lane.b32.xlu0 %v133, 127
        %v137 = vpop.permute.xlu0 %136
        %139 = vrot.lane.b32.xlu0 %v133, 125
        %v140 = vpop.permute.xlu0 %139
        %142 = vrot.lane.b32.xlu0 %v133, 122
        %v143 = vpop.permute.xlu0 %142
        %145 = vrot.lane.b32.xlu0 %v133, 118
        %v146 = vpop.permute.xlu0 %145
        %148 = vrot.lane.b32.xlu0 %v133, 113
        %v149 = vpop.permute.xlu0 %148
        %151 = vrot.lane.b32.xlu0 %v133, 107
        %v152 = vpop.permute.xlu0 %151
        %154 = vrot.lane.b32.xlu0 %v133, 100
        %v155 = vpop.permute.xlu0 %154
        %158 = vrot.lane.b32.xlu0 %v134, 92
        %v159 = vpop.permute.xlu0 %158
        %161 = vrot.lane.b32.xlu0 %v134, 83
        %v162 = vpop.permute.xlu0 %161
        %164 = vrot.lane.b32.xlu0 %v134, 73
        %v165 = vpop.permute.xlu0 %164
        %167 = vrot.lane.b32.xlu0 %v134, 62
        %v168 = vpop.permute.xlu0 %167
        %170 = vrot.lane.b32.xlu0 %v134, 50
        %v171 = vpop.permute.xlu0 %170
        %173 = vrot.lane.b32.xlu0 %v134, 37
        %v174 = vpop.permute.xlu0 %173
        %176 = vrot.lane.b32.xlu0 %v134, 23
        %v177 = vpop.permute.xlu0 %176
        %179 = vrot.lane.b32.xlu0 %v134, 8
        %v180 = vpop.permute.xlu0 %179
        %vm182 = vcmask 130048
        %v183 = vsel %vm182, %v133, %v137
        %vm184 = vcmask 252928
        %v185 = vsel %vm184, %v183, %v140
        %vm186 = vcmask 367616
        %v187 = vsel %vm186, %v185, %v143
        %vm188 = vcmask 474112
        %v189 = vsel %vm188, %v187, %v146
        %vm190 = vcmask 572416
        %v191 = vsel %vm190, %v189, %v149
        %vm192 = vcmask 662528
        %v193 = vsel %vm192, %v191, %v152
        %vm194 = vcmask 744448
        %v195 = vsel %vm194, %v193, %v155
        %vm196 = vcmask 818176
        %v197 = vsel %vm196, %v195, %v159
        %vm198 = vcmask 883712
        %v199 = vsel %vm198, %v197, %v162
        %vm200 = vcmask 941056
        %v201 = vsel %vm200, %v199, %v165
        %vm202 = vcmask 990208
        %v203 = vsel %vm202, %v201, %v168
        %vm204 = vcmask 1031168
        %v205 = vsel %vm204, %v203, %v171
        %vm206 = vcmask 15360
        %v207 = vsel %vm206, %v171, %v174
        %vm208 = vcmask 39936
        %v209 = vsel %vm208, %v207, %v177
        %vm210 = vcmask 56320
        %v211 = vsel %vm210, %v209, %v180
        %212 = vst [vmem:[%s132] sm:$0xff] %v205
        %vm213 = vcmask 64512
        %214 = vst.msk [vmem:[%s132 + $0x8] sm:$0xff] %vm213, %v211
        %s215 = sand.u32 %s52, 1
        %s216 = scalar_lea.sflag [#allocation4], %s215
        %s217 = sand.u32 %s52, 1
        %s218 = smul.addr %s217, 16
        %s219 = scalar_lea.vmem [#allocation5], %s218
        // Predicated region
        $region29: #{tpu_custom_call.1} parent=23 // pred_check
          %p220 = pneg %p62
        $region30: #{tpu_custom_call.1} parent=23 // pred_check_branch
          %222 = sbr.rel (%p220) target = $region32
        $region31: #{tpu_custom_call.1} parent=23 // pred_region
          %s224 = ssub.s32 256, 256
          %225 = vsyncadd %s216, %s224
          %s226 = smul.addr %s18, 2
          %s227 = smul.addr %s226, 128
          %s228 = scalar_lea.hbm %s1, %s227
          %s230 = sshll.u32 %s219, 4
          %s231 = int_to_ptr.vmem [resolvable:$true] %s230
          %233 = dma.vmem_to_hbm [thread:$0]  %s231, 256, %s228, %s216
        $region32: #{tpu_custom_call.1} parent=23 // pred_fallthru
          _
      $region24: #{tpu_custom_call.1} parent=5 // pred_fallthru
        _
      %p234 = scmp.le.s32.totalorder 2, %s13
      // Predicated region
      $region33: #{tpu_custom_call.1} parent=5 // pred_check
        %p235 = pneg %p234
      $region34: #{tpu_custom_call.1} parent=5 // pred_check_branch
        %237 = sbr.rel (%p235) target = $region36
      $region35: #{tpu_custom_call.1} parent=5 // pred_region
        %s238 = ssub.s32 %s13, 2
        // Predicated region
        $region37: #{tpu_custom_call.1} parent=35 // pred_check
          %p239 = pneg %p68
        $region38: #{tpu_custom_call.1} parent=35 // pred_check_branch
          %241 = sbr.rel (%p239) target = $region40
        $region39: #{tpu_custom_call.1} parent=35 // pred_region
          %s242 = sand.u32 %s53, 1
          %s243 = scalar_lea.sflag [#allocation4], %s242
          %s244 = sand.u32 %s53, 1
          %s245 = smul.addr %s244, 16
          %s246 = scalar_lea.vmem [#allocation5], %s245
          %247 = dma.done %s243, 256
        $region40: #{tpu_custom_call.1} parent=35 // pred_fallthru
          _
      $region36: #{tpu_custom_call.1} parent=5 // pred_fallthru
        _
    $region6: #{tpu_custom_call.1} parent=1 // loop_footer
      %s17 = sadd.s32 1, %s13
    $region7: #{tpu_custom_call.1} parent=1 // loop_footer_branch
      %12 = sbr.rel target = $region3
    $region8: #{tpu_custom_call.1} parent=1 // loop_exit
      _
    %248 = vsyncpa [#allocation3], 1
    %s249 = scalar_lea.sflag [#allocation3], 1
    %250 = vsyncpa %s249, 1
    %251 = vsyncpa [#allocation4], 1
    %s252 = scalar_lea.sflag [#allocation4], 1
    %253 = vsyncpa %s252, 1

</llo_original>
